<compile_context>
chip_gen: v6e
topology: v6e:2x2x1
jax: 0.10.0
libtpu: 0.0.40
codegen_flags: <defaults>
</compile_context>

<pallas_src>
import functools
import warnings

import jax
import jax.numpy as jnp
from jax.experimental import pallas as pl
from jax.experimental.pallas import tpu as pltpu

_LANES = 128
_SUBLANES = 8


def _fbeta_stats_kernel(pred_ref, true_ref, tp_ref, sp_ref, st_ref, *,
                        rows_total, tile_rows, blocks_per_split,
                        first_masked_block, needs_any_mask):
    """Accumulate per-sample sum(t*p), sum(p), sum(t) into (8,128) partials."""
    j = pl.program_id(2)

    @pl.when(j == 0)
    def _init():
        tp_ref[...] = jnp.zeros_like(tp_ref)
        sp_ref[...] = jnp.zeros_like(sp_ref)
        st_ref[...] = jnp.zeros_like(st_ref)

    # (tile_rows, 128) block; widen narrow dtypes in-register.
    p = pred_ref[...].astype(jnp.float32)
    t = true_ref[...].astype(jnp.float32)

    def _accumulate(p_blk, t_blk):
        # Reduce the tile to one vreg per stat with cross-vreg VALU adds (no XLU),
        # then RMW the tiny resident output block.
        tp_ref[...] += jnp.sum((t_blk * p_blk).reshape(-1, _SUBLANES, _LANES), axis=0)
        sp_ref[...] += jnp.sum(p_blk.reshape(-1, _SUBLANES, _LANES), axis=0)
        st_ref[...] += jnp.sum(t_blk.reshape(-1, _SUBLANES, _LANES), axis=0)

    if not needs_any_mask:
        # Common case: rows divide evenly and splits partition exactly.
        _accumulate(p, t)
    else:
        s = pl.program_id(1)
        gb = s * blocks_per_split + j           # intended global row-block index

        @pl.when(gb < first_masked_block)
        def _fast():                            # fully valid block: no mask work
            _accumulate(p, t)

        @pl.when(gb >= first_masked_block)
        def _tail():
            # Partial last block (garbage tail rows from the boundary DMA) or an
            # intended-OOB block from the split (index_map clamps its DMA to the
            # last valid block; the mask below then zeroes everything).
            row_ids = jax.lax.broadcasted_iota(jnp.int32, (tile_rows, _LANES), 0)
            valid = (gb * tile_rows + row_ids) < rows_total
            _accumulate(jnp.where(valid, p, 0.0), jnp.where(valid, t, 0.0))


def _preprocess(y_pred, y_true, *, include_background, to_onehot_y, softmax):
    """MONAI-like pre-processing glue (plain JAX)."""
    n_pred_ch = y_pred.shape[1]
    if softmax:
        if n_pred_ch == 1:
            warnings.warn('single channel prediction, `softmax=True` ignored.')
        else:
            y_pred = jax.nn.softmax(y_pred, axis=1)
    if to_onehot_y:
        if n_pred_ch == 1:
            warnings.warn('single channel prediction, `to_onehot_y=True` ignored.')
        else:
            if y_true.ndim == y_pred.ndim and y_true.shape[1] == 1:
                y_true = jnp.squeeze(y_true, axis=1)
            # 0/1 one-hot values are exact in bf16 -> halves y_true HBM traffic
            # for the bandwidth-bound stats kernel (widened to f32 in-register).
            oh = jax.nn.one_hot(y_true.astype(jnp.int32), n_pred_ch,
                                dtype=jnp.bfloat16)
            y_true = jnp.moveaxis(oh, -1, 1)
    if not include_background:
        if n_pred_ch == 1:
            warnings.warn('single channel prediction, '
                          '`include_background=False` ignored.')
        else:
            y_pred = y_pred[:, 1:]
            y_true = y_true[:, 1:]
    if y_pred.shape != y_true.shape:
        raise AssertionError(
            f'ground truth has different shape ({y_true.shape}) from input '
            f'({y_pred.shape})')
    return y_pred, y_true


def _sublane_multiple(dtype):
    # f32 -> 8, bf16/f16 -> 16, int8/fp8 -> 32 sublane packing.
    return max(_SUBLANES, 32 // jnp.dtype(dtype).itemsize)


def fbeta_loss(y_pred, y_true, *, beta=1.0, smooth=1e-7,
               include_background=True, to_onehot_y=False, softmax=False,
               tile_rows=1024):
    """F-beta loss matching the PyTorch FbetaLoss module (scalar output)."""
    y_pred, y_true = _preprocess(y_pred, y_true,
                                 include_background=include_background,
                                 to_onehot_y=to_onehot_y, softmax=softmax)

    n = y_pred.shape[0]
    pred2d = y_pred.reshape(n, -1)     # keep original dtype: stream narrow from HBM
    true2d = y_true.reshape(n, -1)
    m = pred2d.shape[1]

    # TODO(synk): reshaping to (n, rows, 128) requires C*H*W % 128 == 0; in the
    # rare ragged-lane case we still pay one HBM copy here.  A fully pad-free
    # path would need a manual-DMA (memory_space=pl.ANY) variant.
    if m % _LANES != 0:
        pad = _LANES - (m % _LANES)
        pred2d = jnp.pad(pred2d, ((0, 0), (0, pad)))
        true2d = jnp.pad(true2d, ((0, 0), (0, pad)))
        m = m + pad

    rows = m // _LANES
    pred3d = pred2d.reshape(n, rows, _LANES)
    true3d = true2d.reshape(n, rows, _LANES)

    # Tile rows: multiple of the narrow-dtype sublane packing so narrow inputs
    # stay fully packed, clamped to the rounded-up row count.
    sub = max(_sublane_multiple(pred3d.dtype), _sublane_multiple(true3d.dtype))
    tr = max(sub, (int(tile_rows) // sub) * sub)
    tr = min(tr, pl.cdiv(rows, sub) * sub)

    total_blocks = pl.cdiv(rows, tr)

    # v7x megacore: batch and split axes are "parallel"; when the batch alone
    # can't balance two TensorCores (odd N, incl. N == 1), also split the
    # row-block range in two.  Single extra grid axis of size 1/2 elsewhere.
    num_splits = 2 if (n % 2 == 1 and total_blocks >= 2) else 1
    bps = pl.cdiv(total_blocks, num_splits)

    first_masked_block = rows // tr    # blocks >= this need (partial/full) masking
    needs_any_mask = (rows % tr != 0) or (num_splits * bps > total_blocks)

    kernel = functools.partial(
        _fbeta_stats_kernel, rows_total=rows, tile_rows=tr,
        blocks_per_split=bps, first_masked_block=first_masked_block,
        needs_any_mask=needs_any_mask)

    def in_map(i, s, j):
        # Clamp intended-OOB blocks (only possible when the split doesn't divide
        # the block count) onto the last valid block; the kernel masks them out.
        return (i, jnp.minimum(s * bps + j, total_blocks - 1), 0)

    stat_shape = jax.ShapeDtypeStruct((n, num_splits, _SUBLANES, _LANES),
                                      jnp.float32)
    stat_spec = pl.BlockSpec((None, None, _SUBLANES, _LANES),
                             lambda i, s, j: (i, s, 0, 0))

    tp_o, sp_o, st_o = pl.pallas_call(
        kernel,
        out_shape=(stat_shape, stat_shape, stat_shape),
        grid_spec=pltpu.PrefetchScalarGridSpec(
            num_scalar_prefetch=0,
            grid=(n, num_splits, bps),
            in_specs=[
                pl.BlockSpec((None, tr, _LANES), in_map),
                pl.BlockSpec((None, tr, _LANES), in_map),
            ],
            out_specs=(stat_spec, stat_spec, stat_spec),
        ),
        compiler_params=pltpu.CompilerParams(
            dimension_semantics=("parallel", "parallel", "arbitrary")),
    )(pred3d, true3d)

    # Tiny epilogue over the (N, splits, 8, 128) partial stats (plain JAX).
    tp = tp_o.sum(axis=(1, 2, 3))
    sp = sp_o.sum(axis=(1, 2, 3))
    st = st_o.sum(axis=(1, 2, 3))
    fp = sp - tp                      # sum((1 - t) * p)
    fn = st - tp                      # sum(t * (1 - p))
    beta_sq = float(beta) ** 2
    smooth = float(smooth)
    precision = (tp + smooth) / (tp + fp + smooth)
    recall = (tp + smooth) / (tp + fn + smooth)
    fbeta = ((1.0 + beta_sq) * precision * recall
             / (beta_sq * precision + recall + smooth))
    return 1.0 - jnp.mean(fbeta)


def _fbeta_loss_ref(y_pred, y_true, *, beta=1.0, smooth=1e-7,
                    include_background=True, to_onehot_y=False, softmax=False):
    y_pred, y_true = _preprocess(y_pred, y_true,
                                 include_background=include_background,
                                 to_onehot_y=to_onehot_y, softmax=softmax)
    n = y_pred.shape[0]
    p = y_pred.reshape(n, -1).astype(jnp.float32)
    t = y_true.reshape(n, -1).astype(jnp.float32)
    tp = jnp.sum(t * p, axis=1)
    fp = jnp.sum((1 - t) * p, axis=1)
    fn = jnp.sum(t * (1 - p), axis=1)
    precision = (tp + smooth) / (tp + fp + smooth)
    recall = (tp + smooth) / (tp + fn + smooth)
    beta_sq = beta ** 2
    fbeta = ((1 + beta_sq) * precision * recall
             / (beta_sq * precision + recall + smooth))
    return 1 - fbeta.mean()


if __name__ == "__main__":
    key = jax.random.PRNGKey(0)
    keys = jax.random.split(key, 10)

    # Test 1: probabilities vs soft masks, (2, 4, 16, 16) — single full block.
    N, C, H, W = 2, 4, 16, 16
    y_pred = jax.random.uniform(keys[0], (N, C, H, W), dtype=jnp.float32)
    y_true = (jax.random.uniform(keys[1], (N, C, H, W)) > 0.5).astype(jnp.float32)
    loss = jax.block_until_ready(fbeta_loss(y_pred, y_true, beta=1.0))
    ref = _fbeta_loss_ref(y_pred, y_true, beta=1.0)
    assert jnp.allclose(loss, ref, atol=1e-5, rtol=1e-5), (loss, ref)

    # Test 2: ragged last row-block (rows=12, tile_rows=8) — masked tail branch.
    yp2 = jax.random.uniform(keys[2], (N, 6, H, W), dtype=jnp.float32)
    yt2 = (jax.random.uniform(keys[3], (N, 6, H, W)) > 0.5).astype(jnp.float32)
    loss2 = jax.block_until_ready(fbeta_loss(yp2, yt2, beta=2.0, tile_rows=8))
    ref2 = _fbeta_loss_ref(yp2, yt2, beta=2.0)
    assert jnp.allclose(loss2, ref2, atol=1e-5, rtol=1e-5), (loss2, ref2)

    # Test 3: softmax + bf16 one-hot + include_background=False glue path
    # (bf16 ground truth -> 16-row sublane rounding, oversize masked block).
    logits = jax.random.normal(keys[4], (N, C, H, W), dtype=jnp.float32)
    labels = jax.random.randint(keys[5], (N, H, W), 0, C)
    loss3 = jax.block_until_ready(
        fbeta_loss(logits, labels, softmax=True, to_onehot_y=True,
                   include_background=False))
    ref3 = _fbeta_loss_ref(logits, labels, softmax=True, to_onehot_y=True,
                           include_background=False)
    assert jnp.allclose(loss3, ref3, atol=1e-5, rtol=1e-5), (loss3, ref3)

    # Test 4: N=1 -> megacore row-split (2 splits x 2 blocks), no masking.
    yp4 = jax.random.uniform(keys[6], (1, 4, 32, 32), dtype=jnp.float32)
    yt4 = (jax.random.uniform(keys[7], (1, 4, 32, 32)) > 0.5).astype(jnp.float32)
    loss4 = jax.block_until_ready(fbeta_loss(yp4, yt4, beta=1.0, tile_rows=8))
    ref4 = _fbeta_loss_ref(yp4, yt4, beta=1.0)
    assert jnp.allclose(loss4, ref4, atol=1e-5, rtol=1e-5), (loss4, ref4)

    # Test 5: N=1 with 3 row-blocks -> split produces one clamped, fully-masked
    # OOB block (exercises the index_map clamp + full-mask branch).
    yp5 = jax.random.uniform(keys[8], (1, 3, 32, 32), dtype=jnp.float32)
    yt5 = (jax.random.uniform(keys[9], (1, 3, 32, 32)) > 0.5).astype(jnp.float32)
    loss5 = jax.block_until_ready(fbeta_loss(yp5, yt5, beta=0.5, tile_rows=8))
    ref5 = _fbeta_loss_ref(yp5, yt5, beta=0.5)
    assert jnp.allclose(loss5, ref5, atol=1e-5, rtol=1e-5), (loss5, ref5)

    print("KERNEL_OK")
</pallas_src>

<mosaic_0001>
module attributes {stable_mosaic.version = 11 : i64} {
  func.func @_fbeta_stats_kernel(%arg0: i32, %arg1: i32, %arg2: i32, %arg3: memref<1x8x128xf32, #tpu.memory_space<vmem>>, %arg4: memref<1x8x128xf32, #tpu.memory_space<vmem>>, %arg5: memref<1x1x8x128xf32, #tpu.memory_space<vmem>>, %arg6: memref<1x1x8x128xf32, #tpu.memory_space<vmem>>, %arg7: memref<1x1x8x128xf32, #tpu.memory_space<vmem>>) attributes {dimension_semantics = [#tpu.dimension_semantics<parallel>, #tpu.dimension_semantics<parallel>, #tpu.dimension_semantics<arbitrary>], iteration_bounds = array<i64: 2, 1, 1>, scalar_prefetch = 0 : i64, scratch_operands = 0 : i64, tpu.core_type = #tpu.core_type<tc>, window_params = [{transform_indices = @transform_0, window_bounds = array<i64: 1, 8, 128>}, {transform_indices = @transform_1, window_bounds = array<i64: 1, 8, 128>}, {transform_indices = @transform_2, window_bounds = array<i64: 1, 1, 8, 128>}, {transform_indices = @transform_3, window_bounds = array<i64: 1, 1, 8, 128>}, {transform_indices = @transform_4, window_bounds = array<i64: 1, 1, 8, 128>}]} {
    %c0_i32 = arith.constant 0 : i32
    %0 = arith.cmpi eq, %arg2, %c0_i32 : i32
    %1 = arith.extui %0 : i1 to i32
    %c0_i32_0 = arith.constant 0 : i32
    %2 = arith.cmpi ne, %1, %c0_i32_0 : i32
    scf.if %2 {
      %cst_32 = arith.constant 0.000000e+00 : f32
      %32 = vector.broadcast %cst_32 : f32 to vector<8x128xf32>
      %c0_33 = arith.constant 0 : index
      %c0_34 = arith.constant 0 : index
      %c0_35 = arith.constant 0 : index
      %c0_36 = arith.constant 0 : index
      %33 = vector.load %arg5[%c0_33, %c0_34, %c0_35, %c0_36] : memref<1x1x8x128xf32, #tpu.memory_space<vmem>>, vector<1x1x8x128xf32>
      %34 = vector.shape_cast %33 : vector<1x1x8x128xf32> to vector<8x128xf32>
      %35 = vector.shape_cast %32 : vector<8x128xf32> to vector<1x1x8x128xf32>
      tpu.vector_store %arg5[%c0_33, %c0_34, %c0_35, %c0_36], %35 {strides = array<i32>} : memref<1x1x8x128xf32, #tpu.memory_space<vmem>>, vector<1x1x8x128xf32>,
      %cst_37 = arith.constant 0.000000e+00 : f32
      %36 = vector.broadcast %cst_37 : f32 to vector<8x128xf32>
      %c0_38 = arith.constant 0 : index
      %c0_39 = arith.constant 0 : index
      %c0_40 = arith.constant 0 : index
      %c0_41 = arith.constant 0 : index
      %37 = vector.load %arg6[%c0_38, %c0_39, %c0_40, %c0_41] : memref<1x1x8x128xf32, #tpu.memory_space<vmem>>, vector<1x1x8x128xf32>
      %38 = vector.shape_cast %37 : vector<1x1x8x128xf32> to vector<8x128xf32>
      %39 = vector.shape_cast %36 : vector<8x128xf32> to vector<1x1x8x128xf32>
      tpu.vector_store %arg6[%c0_38, %c0_39, %c0_40, %c0_41], %39 {strides = array<i32>} : memref<1x1x8x128xf32, #tpu.memory_space<vmem>>, vector<1x1x8x128xf32>,
      %cst_42 = arith.constant 0.000000e+00 : f32
      %40 = vector.broadcast %cst_42 : f32 to vector<8x128xf32>
      %c0_43 = arith.constant 0 : index
      %c0_44 = arith.constant 0 : index
      %c0_45 = arith.constant 0 : index
      %c0_46 = arith.constant 0 : index
      %41 = vector.load %arg7[%c0_43, %c0_44, %c0_45, %c0_46] : memref<1x1x8x128xf32, #tpu.memory_space<vmem>>, vector<1x1x8x128xf32>
      %42 = vector.shape_cast %41 : vector<1x1x8x128xf32> to vector<8x128xf32>
      %43 = vector.shape_cast %40 : vector<8x128xf32> to vector<1x1x8x128xf32>
      tpu.vector_store %arg7[%c0_43, %c0_44, %c0_45, %c0_46], %43 {strides = array<i32>} : memref<1x1x8x128xf32, #tpu.memory_space<vmem>>, vector<1x1x8x128xf32>,
    } else {
    }
    %c0 = arith.constant 0 : index
    %c0_1 = arith.constant 0 : index
    %c0_2 = arith.constant 0 : index
    %3 = vector.load %arg3[%c0, %c0_1, %c0_2] : memref<1x8x128xf32, #tpu.memory_space<vmem>>, vector<1x8x128xf32>
    %4 = vector.shape_cast %3 : vector<1x8x128xf32> to vector<8x128xf32>
    %c0_3 = arith.constant 0 : index
    %c0_4 = arith.constant 0 : index
    %c0_5 = arith.constant 0 : index
    %5 = vector.load %arg4[%c0_3, %c0_4, %c0_5] : memref<1x8x128xf32, #tpu.memory_space<vmem>>, vector<1x8x128xf32>
    %6 = vector.shape_cast %5 : vector<1x8x128xf32> to vector<8x128xf32>
    %c0_6 = arith.constant 0 : index
    %c0_7 = arith.constant 0 : index
    %c0_8 = arith.constant 0 : index
    %c0_9 = arith.constant 0 : index
    %7 = vector.load %arg5[%c0_6, %c0_7, %c0_8, %c0_9] : memref<1x1x8x128xf32, #tpu.memory_space<vmem>>, vector<1x1x8x128xf32>
    %8 = vector.shape_cast %7 : vector<1x1x8x128xf32> to vector<8x128xf32>
    %9 = arith.mulf %6, %4 : vector<8x128xf32>
    %10 = vector.shape_cast %9 : vector<8x128xf32> to vector<1x8x128xf32>
    %cst = arith.constant dense<0.000000e+00> : vector<8x128xf32>
    %11 = vector.multi_reduction <add>, %10, %cst [0] : vector<1x8x128xf32> to vector<8x128xf32>
    %12 = arith.addf %8, %11 : vector<8x128xf32>
    %c0_10 = arith.constant 0 : index
    %c0_11 = arith.constant 0 : index
    %c0_12 = arith.constant 0 : index
    %c0_13 = arith.constant 0 : index
    %13 = vector.load %arg5[%c0_10, %c0_11, %c0_12, %c0_13] : memref<1x1x8x128xf32, #tpu.memory_space<vmem>>, vector<1x1x8x128xf32>
    %14 = vector.shape_cast %13 : vector<1x1x8x128xf32> to vector<8x128xf32>
    %15 = vector.shape_cast %12 : vector<8x128xf32> to vector<1x1x8x128xf32>
    tpu.vector_store %arg5[%c0_10, %c0_11, %c0_12, %c0_13], %15 {strides = array<i32>} : memref<1x1x8x128xf32, #tpu.memory_space<vmem>>, vector<1x1x8x128xf32>,
    %c0_14 = arith.constant 0 : index
    %c0_15 = arith.constant 0 : index
    %c0_16 = arith.constant 0 : index
    %c0_17 = arith.constant 0 : index
    %16 = vector.load %arg6[%c0_14, %c0_15, %c0_16, %c0_17] : memref<1x1x8x128xf32, #tpu.memory_space<vmem>>, vector<1x1x8x128xf32>
    %17 = vector.shape_cast %16 : vector<1x1x8x128xf32> to vector<8x128xf32>
    %18 = vector.shape_cast %4 : vector<8x128xf32> to vector<1x8x128xf32>
    %cst_18 = arith.constant dense<0.000000e+00> : vector<8x128xf32>
    %19 = vector.multi_reduction <add>, %18, %cst_18 [0] : vector<1x8x128xf32> to vector<8x128xf32>
    %20 = arith.addf %17, %19 : vector<8x128xf32>
    %c0_19 = arith.constant 0 : index
    %c0_20 = arith.constant 0 : index
    %c0_21 = arith.constant 0 : index
    %c0_22 = arith.constant 0 : index
    %21 = vector.load %arg6[%c0_19, %c0_20, %c0_21, %c0_22] : memref<1x1x8x128xf32, #tpu.memory_space<vmem>>, vector<1x1x8x128xf32>
    %22 = vector.shape_cast %21 : vector<1x1x8x128xf32> to vector<8x128xf32>
    %23 = vector.shape_cast %20 : vector<8x128xf32> to vector<1x1x8x128xf32>
    tpu.vector_store %arg6[%c0_19, %c0_20, %c0_21, %c0_22], %23 {strides = array<i32>} : memref<1x1x8x128xf32, #tpu.memory_space<vmem>>, vector<1x1x8x128xf32>,
    %c0_23 = arith.constant 0 : index
    %c0_24 = arith.constant 0 : index
    %c0_25 = arith.constant 0 : index
    %c0_26 = arith.constant 0 : index
    %24 = vector.load %arg7[%c0_23, %c0_24, %c0_25, %c0_26] : memref<1x1x8x128xf32, #tpu.memory_space<vmem>>, vector<1x1x8x128xf32>
    %25 = vector.shape_cast %24 : vector<1x1x8x128xf32> to vector<8x128xf32>
    %26 = vector.shape_cast %6 : vector<8x128xf32> to vector<1x8x128xf32>
    %cst_27 = arith.constant dense<0.000000e+00> : vector<8x128xf32>
    %27 = vector.multi_reduction <add>, %26, %cst_27 [0] : vector<1x8x128xf32> to vector<8x128xf32>
    %28 = arith.addf %25, %27 : vector<8x128xf32>
    %c0_28 = arith.constant 0 : index
    %c0_29 = arith.constant 0 : index
    %c0_30 = arith.constant 0 : index
    %c0_31 = arith.constant 0 : index
    %29 = vector.load %arg7[%c0_28, %c0_29, %c0_30, %c0_31] : memref<1x1x8x128xf32, #tpu.memory_space<vmem>>, vector<1x1x8x128xf32>
    %30 = vector.shape_cast %29 : vector<1x1x8x128xf32> to vector<8x128xf32>
    %31 = vector.shape_cast %28 : vector<8x128xf32> to vector<1x1x8x128xf32>
    tpu.vector_store %arg7[%c0_28, %c0_29, %c0_30, %c0_31], %31 {strides = array<i32>} : memref<1x1x8x128xf32, #tpu.memory_space<vmem>>, vector<1x1x8x128xf32>,
    return
  }
  func.func @transform_0(%arg0: i32, %arg1: i32, %arg2: i32) -> (i32, i32, i32) {
    %c1_i32 = arith.constant 1 : i32
    %0 = arith.muli %arg1, %c1_i32 : i32
    %1 = arith.addi %0, %arg2 : i32
    %c0_i32 = arith.constant 0 : i32
    %2 = arith.minsi %1, %c0_i32 : i32
    %c0_i32_0 = arith.constant 0 : i32
    %c0_i32_1 = arith.constant 0 : i32
    return %arg0, %2, %c0_i32_0 : i32, i32, i32
  }
  func.func @transform_1(%arg0: i32, %arg1: i32, %arg2: i32) -> (i32, i32, i32) {
    %c1_i32 = arith.constant 1 : i32
    %0 = arith.muli %arg1, %c1_i32 : i32
    %1 = arith.addi %0, %arg2 : i32
    %c0_i32 = arith.constant 0 : i32
    %2 = arith.minsi %1, %c0_i32 : i32
    %c0_i32_0 = arith.constant 0 : i32
    %c0_i32_1 = arith.constant 0 : i32
    return %arg0, %2, %c0_i32_0 : i32, i32, i32
  }
  func.func @transform_2(%arg0: i32, %arg1: i32, %arg2: i32) -> (i32, i32, i32, i32) {
    %c0_i32 = arith.constant 0 : i32
    %c0_i32_0 = arith.constant 0 : i32
    %c0_i32_1 = arith.constant 0 : i32
    return %arg0, %arg1, %c0_i32, %c0_i32_0 : i32, i32, i32, i32
  }
  func.func @transform_3(%arg0: i32, %arg1: i32, %arg2: i32) -> (i32, i32, i32, i32) {
    %c0_i32 = arith.constant 0 : i32
    %c0_i32_0 = arith.constant 0 : i32
    %c0_i32_1 = arith.constant 0 : i32
    return %arg0, %arg1, %c0_i32, %c0_i32_0 : i32, i32, i32, i32
  }
  func.func @transform_4(%arg0: i32, %arg1: i32, %arg2: i32) -> (i32, i32, i32, i32) {
    %c0_i32 = arith.constant 0 : i32
    %c0_i32_0 = arith.constant 0 : i32
    %c0_i32_1 = arith.constant 0 : i32
    return %arg0, %arg1, %c0_i32, %c0_i32_0 : i32, i32, i32, i32
  }
}

</mosaic_0001>

<llo_original>
// kernel: tpu_custom_call.1
$region0: #{tpu_custom_call.1}
  #allocation0 [shape = 'u32[]', space=smem, size = 0x4, offset = 0x4, fixed_abs, tag = 'smem constant byte address 0x4 - core index']
  #allocation1 [shape = 'u32[144,128]{1,0:T(1,128)}', space=vmem, size = 0x12000, scoped, tag = 'internal scratch']
  %s0 = inlined_call_operand.hbm [shape: f32[2,8,128], index: 0, kind: input, shape index: {}]
  %s1 = inlined_call_operand.hbm [shape: f32[2,8,128], index: 1, kind: input, shape index: {}]
  %s2 = inlined_call_operand.hbm [shape: f32[2,1,8,128], index: 2, kind: output, shape index: {0}]
  %s3 = inlined_call_operand.hbm [shape: f32[2,1,8,128], index: 3, kind: output, shape index: {1}]
  %s4 = inlined_call_operand.hbm [shape: f32[2,1,8,128], index: 4, kind: output, shape index: {2}]
  %5 = xla_tuple %s2, %s3, %s4
  %s6 = sld [smem:[#allocation0]]
  $region69: #{tpu_custom_call.1} parent=0
    _
  %s8 = ssub.s32 1, %s6
  %s9 = scalar_select 0, %s8, %s6
  $region1: #{tpu_custom_call.1} parent=0
    #allocation2 [shape = 'u8[8192]{0}', space=vmem, size = 0x2000, scoped, tag = 'input window, operand 0']
    #allocation3 [shape = 's32[2]{0}', space=sflag, size = 0x8, scoped, tag = 'scoped memory for tpu_custom_call.1']
    #allocation4 [shape = 's32[2]{0}', space=sflag, size = 0x8, scoped, tag = 'scoped memory for tpu_custom_call.1']
    #allocation5 [shape = 'u8[8192]{0}', space=vmem, size = 0x2000, scoped, tag = 'input window, operand 1']
    #allocation6 [shape = 's32[2]{0}', space=sflag, size = 0x8, scoped, tag = 'scoped memory for tpu_custom_call.1']
    #allocation7 [shape = 'u8[8192]{0}', space=vmem, size = 0x2000, scoped, tag = 'output window, operand 0']
    #allocation8 [shape = 'u8[8192]{0}', space=vmem, size = 0x2000, scoped, tag = 'output window, operand 1']
    #allocation9 [shape = 's32[2]{0}', space=sflag, size = 0x8, scoped, tag = 'scoped memory for tpu_custom_call.1']
    #allocation10 [shape = 'u8[8192]{0}', space=vmem, size = 0x2000, scoped, tag = 'output window, operand 2']
    %10 = vsyncpa [#allocation3], 0
    %s11 = scalar_lea.sflag [#allocation3], 1
    %12 = vsyncpa %s11, 0
    %13 = vsyncpa [#allocation6], 0
    %s14 = scalar_lea.sflag [#allocation6], 1
    %15 = vsyncpa %s14, 0
    %16 = vsyncpa [#allocation4], 0
    %s17 = scalar_lea.sflag [#allocation4], 1
    %18 = vsyncpa %s17, 0
    %19 = vsyncpa [#allocation9], 0
    %s20 = scalar_lea.sflag [#allocation9], 1
    %21 = vsyncpa %s20, 0
    loop: start=0, step=1, limit=4
    $region2: #{tpu_custom_call.1} parent=1 // loop_pre_header
      _
    $region3: #{tpu_custom_call.1} parent=1 // loop_header
      %s23 = sphi 0, %s27
      %p24 = scmp.ge.s32.totalorder %s23, 4
      %s30 = sphi 0, %s49
      %s31 = sphi 0, %s45
      %s32 = sphi 0, %s41
      %s33 = sphi 0, %s30
      %s34 = sphi 0, %s31
      %s35 = sphi 0, %s32
      %s36 = sphi 0, %s33
      %s37 = sphi 0, %s34
      %s38 = sphi 0, %s35
      %s60 = sphi 0, %s62
      %s63 = sphi 0, %s60
      %s64 = sphi 0, %s63
      %s80 = sphi 0, %s64
      %s94 = sphi 0, %s96
      %s97 = sphi 0, %s94
      %s98 = sphi 0, %s97
      %s114 = sphi 0, %s98
      %s122 = sphi 0, %s124
      %s125 = sphi 0, %s122
      %s126 = sphi 0, %s125
      %s142 = sphi 0, %s126
      %s150 = sphi 0, %s152
      %s153 = sphi 0, %s150
      %s154 = sphi 0, %s153
      %s170 = sphi 0, %s154
      %s178 = sphi 0, %s180
      %s181 = sphi 0, %s178
      %s182 = sphi 0, %s181
      %s198 = sphi 0, %s182
    $region4: #{tpu_custom_call.1} parent=1 // loop_header_branch
      %26 = sbr.rel (%p24) target = $region8
    $region5: #{tpu_custom_call.1} parent=1 // loop_body
      %s28 = ssub.s32 %s23, 1
      %s29 = ssub.s32 %s23, 2
      %s39 = sadd.s32 1, %s32
      %p40 = scmp.ge.s32.totalorder %s39, 1
      %s41 = scalar_select %p40, 0, %s39
      %s42 = sadd.s32 1, %s31
      %s43 = scalar_select %p40, %s42, %s31
      %p44 = scmp.ge.s32.totalorder %s43, 1
      %s45 = scalar_select %p44, 0, %s43
      %s46 = sadd.s32 1, %s30
      %s47 = scalar_select %p44, %s46, %s30
      %p48 = scmp.ge.s32.totalorder %s47, 2
      %s49 = scalar_select %p48, 0, %s47
      %s50 = sadd.s32 %s31, %s32
      %p51 = scmp.lt.s32.totalorder %s50, 0
      %s52 = scalar_select %p51, %s50, 0
      %s53 = sadd.s32 %s45, %s41
      %p54 = scmp.lt.s32.totalorder %s53, 0
      %s55 = scalar_select %p54, %s53, 0
      %s56 = ssub.s32 %s30, %s49
      %s57 = ssub.s32 %s52, %s55
      %s58 = sor.u32 %s56, %s57
      %p59 = scmp.eq.s32.totalorder %s58, 0
      %s61 = sadd.s32 %s60, 1
      %s62 = scalar_select %p59, %s60, %s61
      %p65 = pneg %p59
      %p66 = scmp.eq.s32.totalorder %s23, 1
      %p67 = por %p65, %p66
      %p68 = scmp.ne.s32.totalorder %s60, %s63
      %p69 = scmp.eq.s32.totalorder %s23, 0
      %p70 = por %p68, %p69
      %p71 = scmp.ne.s32.totalorder %s60, %s63
      %p72 = scmp.eq.s32.totalorder %s28, 1
      %p73 = por %p71, %p72
      %p74 = scmp.ne.s32.totalorder %s63, %s64
      %p75 = scmp.eq.s32.totalorder %s28, 0
      %p76 = por %p74, %p75
      %p77 = scmp.ne.s32.totalorder %s63, %s64
      %p78 = scmp.eq.s32.totalorder %s29, 1
      %p79 = por %p77, %p78
      %p81 = scmp.ne.s32.totalorder %s64, %s80
      %p82 = scmp.eq.s32.totalorder %s29, 0
      %p83 = por %p81, %p82
      %s84 = sadd.s32 %s31, %s32
      %p85 = scmp.lt.s32.totalorder %s84, 0
      %s86 = scalar_select %p85, %s84, 0
      %s87 = sadd.s32 %s45, %s41
      %p88 = scmp.lt.s32.totalorder %s87, 0
      %s89 = scalar_select %p88, %s87, 0
      %s90 = ssub.s32 %s30, %s49
      %s91 = ssub.s32 %s86, %s89
      %s92 = sor.u32 %s90, %s91
      %p93 = scmp.eq.s32.totalorder %s92, 0
      %s95 = sadd.s32 %s94, 1
      %s96 = scalar_select %p93, %s94, %s95
      %p99 = pneg %p93
      %p100 = scmp.eq.s32.totalorder %s23, 1
      %p101 = por %p99, %p100
      %p102 = scmp.ne.s32.totalorder %s94, %s97
      %p103 = scmp.eq.s32.totalorder %s23, 0
      %p104 = por %p102, %p103
      %p105 = scmp.ne.s32.totalorder %s94, %s97
      %p106 = scmp.eq.s32.totalorder %s28, 1
      %p107 = por %p105, %p106
      %p108 = scmp.ne.s32.totalorder %s97, %s98
      %p109 = scmp.eq.s32.totalorder %s28, 0
      %p110 = por %p108, %p109
      %p111 = scmp.ne.s32.totalorder %s97, %s98
      %p112 = scmp.eq.s32.totalorder %s29, 1
      %p113 = por %p111, %p112
      %p115 = scmp.ne.s32.totalorder %s98, %s114
      %p116 = scmp.eq.s32.totalorder %s29, 0
      %p117 = por %p115, %p116
      %s118 = ssub.s32 %s30, %s49
      %s119 = ssub.s32 %s31, %s45
      %s120 = sor.u32 %s118, %s119
      %p121 = scmp.eq.s32.totalorder %s120, 0
      %s123 = sadd.s32 %s122, 1
      %s124 = scalar_select %p121, %s122, %s123
      %p127 = pneg %p121
      %p128 = scmp.eq.s32.totalorder %s23, 1
      %p129 = por %p127, %p128
      %p130 = scmp.ne.s32.totalorder %s122, %s125
      %p131 = scmp.eq.s32.totalorder %s23, 0
      %p132 = por %p130, %p131
      %p133 = scmp.ne.s32.totalorder %s122, %s125
      %p134 = scmp.eq.s32.totalorder %s28, 1
      %p135 = por %p133, %p134
      %p136 = scmp.ne.s32.totalorder %s125, %s126
      %p137 = scmp.eq.s32.totalorder %s28, 0
      %p138 = por %p136, %p137
      %p139 = scmp.ne.s32.totalorder %s125, %s126
      %p140 = scmp.eq.s32.totalorder %s29, 1
      %p141 = por %p139, %p140
      %p143 = scmp.ne.s32.totalorder %s126, %s142
      %p144 = scmp.eq.s32.totalorder %s29, 0
      %p145 = por %p143, %p144
      %s146 = ssub.s32 %s30, %s49
      %s147 = ssub.s32 %s31, %s45
      %s148 = sor.u32 %s146, %s147
      %p149 = scmp.eq.s32.totalorder %s148, 0
      %s151 = sadd.s32 %s150, 1
      %s152 = scalar_select %p149, %s150, %s151
      %p155 = pneg %p149
      %p156 = scmp.eq.s32.totalorder %s23, 1
      %p157 = por %p155, %p156
      %p158 = scmp.ne.s32.totalorder %s150, %s153
      %p159 = scmp.eq.s32.totalorder %s23, 0
      %p160 = por %p158, %p159
      %p161 = scmp.ne.s32.totalorder %s150, %s153
      %p162 = scmp.eq.s32.totalorder %s28, 1
      %p163 = por %p161, %p162
      %p164 = scmp.ne.s32.totalorder %s153, %s154
      %p165 = scmp.eq.s32.totalorder %s28, 0
      %p166 = por %p164, %p165
      %p167 = scmp.ne.s32.totalorder %s153, %s154
      %p168 = scmp.eq.s32.totalorder %s29, 1
      %p169 = por %p167, %p168
      %p171 = scmp.ne.s32.totalorder %s154, %s170
      %p172 = scmp.eq.s32.totalorder %s29, 0
      %p173 = por %p171, %p172
      %s174 = ssub.s32 %s30, %s49
      %s175 = ssub.s32 %s31, %s45
      %s176 = sor.u32 %s174, %s175
      %p177 = scmp.eq.s32.totalorder %s176, 0
      %s179 = sadd.s32 %s178, 1
      %s180 = scalar_select %p177, %s178, %s179
      %p183 = pneg %p177
      %p184 = scmp.eq.s32.totalorder %s23, 1
      %p185 = por %p183, %p184
      %p186 = scmp.ne.s32.totalorder %s178, %s181
      %p187 = scmp.eq.s32.totalorder %s23, 0
      %p188 = por %p186, %p187
      %p189 = scmp.ne.s32.totalorder %s178, %s181
      %p190 = scmp.eq.s32.totalorder %s28, 1
      %p191 = por %p189, %p190
      %p192 = scmp.ne.s32.totalorder %s181, %s182
      %p193 = scmp.eq.s32.totalorder %s28, 0
      %p194 = por %p192, %p193
      %p195 = scmp.ne.s32.totalorder %s181, %s182
      %p196 = scmp.eq.s32.totalorder %s29, 1
      %p197 = por %p195, %p196
      %p199 = scmp.ne.s32.totalorder %s182, %s198
      %p200 = scmp.eq.s32.totalorder %s29, 0
      %p201 = por %p199, %p200
      %p202 = scmp.le.s32.totalorder 1, %s23
      %p203 = scmp.lt.s32.totalorder %s23, 3
      %p204 = pnand %p202, %p203
      %p205 = pneg %p204
      // Predicated region
      $region9: #{tpu_custom_call.1} parent=5 // pred_check
        _
      $region10: #{tpu_custom_call.1} parent=5 // pred_check_branch
        %207 = sbr.rel (%p204) target = $region12
      $region11: #{tpu_custom_call.1} parent=5 // pred_region
        %s208 = ssub.s32 %s23, 1
      $region12: #{tpu_custom_call.1} parent=5 // pred_fallthru
        _
      %p209 = scmp.lt.s32.totalorder %s23, 2
      // Predicated region
      $region13: #{tpu_custom_call.1} parent=5 // pred_check
        %p210 = pneg %p209
      $region14: #{tpu_custom_call.1} parent=5 // pred_check_branch
        %212 = sbr.rel (%p210) target = $region16
      $region15: #{tpu_custom_call.1} parent=5 // pred_region
        // Predicated region
        $region17: #{tpu_custom_call.1} parent=15 // pred_check
          %p213 = pneg %p70
        $region18: #{tpu_custom_call.1} parent=15 // pred_check_branch
          %215 = sbr.rel (%p213) target = $region20
        $region19: #{tpu_custom_call.1} parent=15 // pred_region
          %s216 = sand.u32 %s60, 1
          %s217 = scalar_lea.sflag [#allocation3], %s216
          %s218 = sand.u32 %s60, 1
          %s219 = smul.addr %s218, 8
          %s220 = scalar_lea.vmem [#allocation2], %s219
          %s221 = sadd.s32 %s31, %s32
          %p222 = scmp.lt.s32.totalorder %s221, 0
          %s223 = scalar_select %p222, %s221, 0
          %s225 = ssub.s32 128, 128
          %226 = vsyncadd %s217, %s225
          %s227 = sadd.s32 %s223, %s30
          %s228 = smul.addr %s227, 128
          %s229 = scalar_lea.hbm %s0, %s228
          %s231 = sshll.u32 %s220, 4
          %s232 = int_to_ptr.vmem [resolvable:$true] %s231
          %234 = dma.hbm_to_vmem [thread:$0]  %s229, 128, %s232, %s217
        $region20: #{tpu_custom_call.1} parent=15 // pred_fallthru
          _
        // Predicated region
        $region21: #{tpu_custom_call.1} parent=15 // pred_check
          %p235 = pneg %p104
        $region22: #{tpu_custom_call.1} parent=15 // pred_check_branch
          %237 = sbr.rel (%p235) target = $region24
        $region23: #{tpu_custom_call.1} parent=15 // pred_region
          %s238 = sand.u32 %s94, 1
          %s239 = scalar_lea.sflag [#allocation6], %s238
          %s240 = sand.u32 %s94, 1
          %s241 = smul.addr %s240, 8
          %s242 = scalar_lea.vmem [#allocation5], %s241
          %s243 = sadd.s32 %s31, %s32
          %p244 = scmp.lt.s32.totalorder %s243, 0
          %s245 = scalar_select %p244, %s243, 0
          %s247 = ssub.s32 128, 128
          %248 = vsyncadd %s239, %s247
          %s249 = sadd.s32 %s245, %s30
          %s250 = smul.addr %s249, 128
          %s251 = scalar_lea.hbm %s1, %s250
          %s253 = sshll.u32 %s242, 4
          %s254 = int_to_ptr.vmem [resolvable:$true] %s253
          %256 = dma.hbm_to_vmem [thread:$0]  %s251, 128, %s254, %s239
        $region24: #{tpu_custom_call.1} parent=15 // pred_fallthru
          _
      $region16: #{tpu_custom_call.1} parent=5 // pred_fallthru
        _
      %p257 = scmp.le.s32.totalorder 1, %s23
      %p258 = scmp.lt.s32.totalorder %s23, 3
      %p259 = pnand %p257, %p258
      %p260 = pneg %p259
      // Predicated region
      $region25: #{tpu_custom_call.1} parent=5 // pred_check
        _
      $region26: #{tpu_custom_call.1} parent=5 // pred_check_branch
        %262 = sbr.rel (%p259) target = $region28
      $region27: #{tpu_custom_call.1} parent=5 // pred_region
        %s263 = ssub.s32 %s23, 1
        %s264 = sand.u32 %s63, 1
        %s265 = scalar_lea.sflag [#allocation3], %s264
        %s266 = sand.u32 %s63, 1
        %s267 = smul.addr %s266, 8
        %s268 = scalar_lea.vmem [#allocation2], %s267
        // Predicated region
        $region29: #{tpu_custom_call.1} parent=27 // pred_check
          %p269 = pneg %p76
        $region30: #{tpu_custom_call.1} parent=27 // pred_check_branch
          %271 = sbr.rel (%p269) target = $region32
        $region31: #{tpu_custom_call.1} parent=27 // pred_region
          %272 = dma.done %s265, 128
        $region32: #{tpu_custom_call.1} parent=27 // pred_fallthru
          _
        %s273 = sand.u32 %s97, 1
        %s274 = scalar_lea.sflag [#allocation6], %s273
        %s275 = sand.u32 %s97, 1
        %s276 = smul.addr %s275, 8
        %s277 = scalar_lea.vmem [#allocation5], %s276
        // Predicated region
        $region33: #{tpu_custom_call.1} parent=27 // pred_check
          %p278 = pneg %p110
        $region34: #{tpu_custom_call.1} parent=27 // pred_check_branch
          %280 = sbr.rel (%p278) target = $region36
        $region35: #{tpu_custom_call.1} parent=27 // pred_region
          %281 = dma.done %s274, 128
        $region36: #{tpu_custom_call.1} parent=27 // pred_fallthru
          _
        %s282 = sand.u32 %s63, 1
        %s283 = scalar_lea.sflag [#allocation3], %s282
        %s284 = sand.u32 %s63, 1
        %s285 = smul.addr %s284, 8
        %s286 = scalar_lea.vmem [#allocation2], %s285
        %p287 = pneg %p76
        %p288 = pneg %p73
        %s289 = sand.u32 %s97, 1
        %s290 = scalar_lea.sflag [#allocation6], %s289
        %s291 = sand.u32 %s97, 1
        %s292 = smul.addr %s291, 8
        %s293 = scalar_lea.vmem [#allocation5], %s292
        %p294 = pneg %p110
        %p295 = pneg %p107
        %p296 = pneg %p138
        %p297 = pneg %p135
        %s298 = sand.u32 %s125, 1
        %s299 = scalar_lea.sflag [#allocation4], %s298
        %s300 = sand.u32 %s125, 1
        %s301 = smul.addr %s300, 8
        %s302 = scalar_lea.vmem [#allocation7], %s301
        %p303 = pneg %p166
        %p304 = pneg %p163
        %s305 = sand.u32 %s28, 1
        %s306 = scalar_lea.sflag [#allocation9], %s305
        %s307 = sand.u32 %s153, 1
        %s308 = smul.addr %s307, 8
        %s309 = scalar_lea.vmem [#allocation8], %s308
        %p310 = pneg %p194
        %p311 = pneg %p191
        %s312 = sand.u32 %s28, 1
        %s313 = scalar_lea.sflag [#allocation9], %s312
        %s314 = sand.u32 %s181, 1
        %s315 = smul.addr %s314, 8
        %s316 = scalar_lea.vmem [#allocation10], %s315
        %s317 = sadd.s32 %s34, %s35
        %p318 = scmp.lt.s32.totalorder %s317, 0
        %s319 = scalar_select %p318, %s317, 0
        %s320 = sadd.s32 %s34, %s35
        %p321 = scmp.lt.s32.totalorder %s320, 0
        %s322 = scalar_select %p321, %s320, 0
        %p323 = scmp.eq.s32.totalorder %s35, 0
        // Predicated region
        $region37: #{tpu_custom_call.1} parent=27 // pred_check
          %p324 = pneg %p323
        $region38: #{tpu_custom_call.1} parent=27 // pred_check_branch
          %326 = sbr.rel (%p324) target = $region40
        $region39: #{tpu_custom_call.1} parent=27 // pred_region
          %327 = vst [vmem:[%s302] sm:$0xff] 0.0
          %328 = vst [vmem:[%s309] sm:$0xff] 0.0
          %329 = vst [vmem:[%s316] sm:$0xff] 0.0
        $region40: #{tpu_custom_call.1} parent=27 // pred_fallthru
          _
        %v330 = vld [vmem:[%s268] sm:$0xff]
        %v331 = vld [vmem:[%s277] sm:$0xff]
        %v332 = vld [vmem:[%s302] sm:$0xff]
        %v333 = vmul.f32 %v331, %v330
        %v334 = vadd.f32 %v333, 0.0
        %v335 = vadd.f32 %v332, %v334
        %336 = vst [vmem:[%s302] sm:$0xff] %v335
        %v337 = vld [vmem:[%s309] sm:$0xff]
        %v338 = vadd.f32 %v330, 0.0
        %v339 = vadd.f32 %v337, %v338
        %340 = vst [vmem:[%s309] sm:$0xff] %v339
        %v341 = vld [vmem:[%s316] sm:$0xff]
        %v342 = vadd.f32 %v331, 0.0
        %v343 = vadd.f32 %v341, %v342
        %344 = vst [vmem:[%s316] sm:$0xff] %v343
        %s345 = sand.u32 %s125, 1
        %s346 = scalar_lea.sflag [#allocation4], %s345
        %s347 = sand.u32 %s125, 1
        %s348 = smul.addr %s347, 8
        %s349 = scalar_lea.vmem [#allocation7], %s348
        %s350 = sand.u32 %s28, 1
        %s351 = scalar_lea.sflag [#allocation9], %s350
        %s352 = sand.u32 %s153, 1
        %s353 = smul.addr %s352, 8
        %s354 = scalar_lea.vmem [#allocation8], %s353
        %s355 = sand.u32 %s28, 1
        %s356 = scalar_lea.sflag [#allocation9], %s355
        %s357 = sand.u32 %s181, 1
        %s358 = smul.addr %s357, 8
        %s359 = scalar_lea.vmem [#allocation10], %s358
        // Predicated region
        $region41: #{tpu_custom_call.1} parent=27 // pred_check
          %p360 = pneg %p135
        $region42: #{tpu_custom_call.1} parent=27 // pred_check_branch
          %362 = sbr.rel (%p360) target = $region44
        $region43: #{tpu_custom_call.1} parent=27 // pred_region
          %s364 = ssub.s32 128, 128
          %365 = vsyncadd %s346, %s364
          %s366 = sadd.s32 %s34, %s33
          %s367 = smul.addr %s366, 128
          %s368 = scalar_lea.hbm %s2, %s367
          %s370 = sshll.u32 %s349, 4
          %s371 = int_to_ptr.vmem [resolvable:$true] %s370
          %373 = dma.vmem_to_hbm [thread:$0]  %s371, 128, %s368, %s346
        $region44: #{tpu_custom_call.1} parent=27 // pred_fallthru
          _
        // Predicated region
        $region45: #{tpu_custom_call.1} parent=27 // pred_check
          %p374 = pneg %p163
        $region46: #{tpu_custom_call.1} parent=27 // pred_check_branch
          %376 = sbr.rel (%p374) target = $region48
        $region47: #{tpu_custom_call.1} parent=27 // pred_region
          %s378 = ssub.s32 128, 128
          %379 = vsyncadd %s351, %s378
          %s380 = sadd.s32 %s34, %s33
          %s381 = smul.addr %s380, 128
          %s382 = scalar_lea.hbm %s3, %s381
          %s384 = sshll.u32 %s354, 4
          %s385 = int_to_ptr.vmem [resolvable:$true] %s384
          %387 = dma.vmem_to_hbm [thread:$0]  %s385, 128, %s382, %s351
        $region48: #{tpu_custom_call.1} parent=27 // pred_fallthru
          _
        // Predicated region
        $region49: #{tpu_custom_call.1} parent=27 // pred_check
          %p388 = pneg %p191
        $region50: #{tpu_custom_call.1} parent=27 // pred_check_branch
          %390 = sbr.rel (%p388) target = $region52
        $region51: #{tpu_custom_call.1} parent=27 // pred_region
          %s392 = ssub.s32 128, 128
          %393 = vsyncadd %s356, %s392
          %s394 = sadd.s32 %s34, %s33
          %s395 = smul.addr %s394, 128
          %s396 = scalar_lea.hbm %s4, %s395
          %s398 = sshll.u32 %s359, 4
          %s399 = int_to_ptr.vmem [resolvable:$true] %s398
          %401 = dma.vmem_to_hbm [thread:$0]  %s399, 128, %s396, %s356
        $region52: #{tpu_custom_call.1} parent=27 // pred_fallthru
          _
      $region28: #{tpu_custom_call.1} parent=5 // pred_fallthru
        _
      %p402 = scmp.le.s32.totalorder 2, %s23
      // Predicated region
      $region53: #{tpu_custom_call.1} parent=5 // pred_check
        %p403 = pneg %p402
      $region54: #{tpu_custom_call.1} parent=5 // pred_check_branch
        %405 = sbr.rel (%p403) target = $region56
      $region55: #{tpu_custom_call.1} parent=5 // pred_region
        %s406 = ssub.s32 %s23, 2
        // Predicated region
        $region57: #{tpu_custom_call.1} parent=55 // pred_check
          %p407 = pneg %p141
        $region58: #{tpu_custom_call.1} parent=55 // pred_check_branch
          %409 = sbr.rel (%p407) target = $region60
        $region59: #{tpu_custom_call.1} parent=55 // pred_region
          %s410 = sand.u32 %s126, 1
          %s411 = scalar_lea.sflag [#allocation4], %s410
          %s412 = sand.u32 %s126, 1
          %s413 = smul.addr %s412, 8
          %s414 = scalar_lea.vmem [#allocation7], %s413
          %415 = dma.done %s411, 128
        $region60: #{tpu_custom_call.1} parent=55 // pred_fallthru
          _
        // Predicated region
        $region61: #{tpu_custom_call.1} parent=55 // pred_check
          %p416 = pneg %p169
        $region62: #{tpu_custom_call.1} parent=55 // pred_check_branch
          %418 = sbr.rel (%p416) target = $region64
        $region63: #{tpu_custom_call.1} parent=55 // pred_region
          %s419 = sand.u32 %s29, 1
          %s420 = scalar_lea.sflag [#allocation9], %s419
          %s421 = sand.u32 %s154, 1
          %s422 = smul.addr %s421, 8
          %s423 = scalar_lea.vmem [#allocation8], %s422
          %424 = dma.done %s420, 128
        $region64: #{tpu_custom_call.1} parent=55 // pred_fallthru
          _
        // Predicated region
        $region65: #{tpu_custom_call.1} parent=55 // pred_check
          %p425 = pneg %p197
        $region66: #{tpu_custom_call.1} parent=55 // pred_check_branch
          %427 = sbr.rel (%p425) target = $region68
        $region67: #{tpu_custom_call.1} parent=55 // pred_region
          %s428 = sand.u32 %s29, 1
          %s429 = scalar_lea.sflag [#allocation9], %s428
          %s430 = sand.u32 %s182, 1
          %s431 = smul.addr %s430, 8
          %s432 = scalar_lea.vmem [#allocation10], %s431
          %433 = dma.done %s429, 128
        $region68: #{tpu_custom_call.1} parent=55 // pred_fallthru
          _
      $region56: #{tpu_custom_call.1} parent=5 // pred_fallthru
        _
    $region6: #{tpu_custom_call.1} parent=1 // loop_footer
      %s27 = sadd.s32 1, %s23
    $region7: #{tpu_custom_call.1} parent=1 // loop_footer_branch
      %22 = sbr.rel target = $region3
    $region8: #{tpu_custom_call.1} parent=1 // loop_exit
      _
    %434 = vsyncpa [#allocation3], 1
    %s435 = scalar_lea.sflag [#allocation3], 1
    %436 = vsyncpa %s435, 1
    %437 = vsyncpa [#allocation6], 1
    %s438 = scalar_lea.sflag [#allocation6], 1
    %439 = vsyncpa %s438, 1
    %440 = vsyncpa [#allocation4], 1
    %s441 = scalar_lea.sflag [#allocation4], 1
    %442 = vsyncpa %s441, 1
    %443 = vsyncpa [#allocation9], 1
    %s444 = scalar_lea.sflag [#allocation9], 1
    %445 = vsyncpa %s444, 1

</llo_original>
